<compile_context>
chip_gen: v5e
topology: v5e:2x2
jax: 0.10.0
libtpu: 0.0.40
codegen_flags: <defaults>
</compile_context>

<pallas_src>
import jax
import jax.numpy as jnp
from jax.experimental import pallas as pl
from jax.experimental.pallas import tpu as pltpu


def _round_up(n, m):
    return ((n + m - 1) // m) * m


# ---------------------------------------------------------------------------
# Kernel
# ---------------------------------------------------------------------------
def _mlp_kernel(x_ref, w1_ref, b1_ref, w2_ref, b2_ref, w3_ref, b3_ref, o_ref):
    # Cast the streamed x tile to the compute dtype (bf16) *inside* the kernel:
    # VPU work hidden under the next tile's DMA; HBM only sees the native
    # x stream (no wrapper-side cast/pad op).
    x = x_ref[...].astype(w1_ref.dtype)
    # Layer 1: Linear(n_in, 50) + ReLU.  bf16 MXU matmul, f32 accumulation.
    h1 = jnp.dot(x, w1_ref[...], preferred_element_type=jnp.float32)
    h1 = jnp.maximum(h1 + b1_ref[...], 0.0)
    # Layer 2: Linear(50, 10) + ReLU (tiny f32 matmul).
    h2 = jnp.dot(h1, w2_ref[...], preferred_element_type=jnp.float32)
    h2 = jnp.maximum(h2 + b2_ref[...], 0.0)
    # Layer 3: Linear(10, 1) computed as w3 (1,10) contracted with h2 (tb,10)
    # on their last dims -> (1, tb): per-row scalars land lane-major so the
    # output store is a dense (1, tb) row, not a 1-lane (tb, 1) masked store.
    h3 = jax.lax.dot_general(
        w3_ref[...], h2,
        dimension_numbers=(((1,), (1,)), ((), ())),
        preferred_element_type=jnp.float32)                      # (1, tb)
    o_ref[...] = (h3 + b3_ref[...])[None].astype(o_ref.dtype)    # (1, 1, tb)


# ---------------------------------------------------------------------------
# Tile / VMEM heuristics
# ---------------------------------------------------------------------------
_TARGET_X_BYTES_PER_STEP = 2 * 1024 * 1024   # ~2 MiB of streamed x per step


def _vmem_budget_bytes():
    """Per-generation VMEM request: ~3/4 of physical per-core VMEM."""
    try:
        cap = int(pltpu.get_tpu_info().vmem_capacity_bytes)
    except Exception:
        cap = 64 * 1024 * 1024          # conservative fallback (v7x-class VMEM)
    return (cap * 3) // 4               # ~96 MiB on v5e/v6e, ~48 MiB on v7x


def _vmem_estimate_bytes(tb, F, x_itemsize, c_itemsize):
    lane = 128
    f_pad = _round_up(F, lane)
    x_in = 2 * tb * F * x_itemsize        # double-buffered streamed x tile
    x_cast = tb * f_pad * c_itemsize      # in-kernel compute-dtype copy of x
    acts = 2 * tb * lane * 4              # h1/h2 f32 activations, lane-padded
    out = 2 * 8 * tb * 4                  # double-buffered (1, 1, tb) output
    wts = 2 * (f_pad * lane * c_itemsize  # resident w1 (default dbl-buffered)
               + 64 * lane * 4            # w2 (padded)
               + 4 * 8 * lane * 4)        # b1/b2/w3/b3 (padded)
    return x_in + x_cast + acts + out + wts


def _pick_batch_tile(B, F, x_itemsize, c_itemsize, vmem_budget):
    # Scale the tile with F: ~2 MiB of x per step, clamped to [512, 8192] rows,
    # so per-step DMA bytes dominate the fixed ~0.35 us grid-step overhead.
    tb = _TARGET_X_BYTES_PER_STEP // max(F * x_itemsize, 1)
    tb = max(512, min(8192, int(tb)))
    # >= 4 tiles when the batch allows: >= 2 steps per v7x TensorCore so each
    # core's pipeline has an i+1 tile to prefetch (harmless on 1-TC chips).
    tb = min(tb, max(pl.cdiv(B, 4), 1))
    # Alignment: multiples of 128 keep the (1, tb) output store lane-dense;
    # very small batches fall back to sublane (8) alignment.
    align = 128 if tb >= 128 else 8
    tb = _round_up(tb, align)
    # Shrink until the estimate fits comfortably under the VMEM request.
    cap = (vmem_budget * 5) // 6
    while tb > align and _vmem_estimate_bytes(tb, F, x_itemsize, c_itemsize) > cap:
        tb = max(align, _round_up(tb // 2, align))
    return tb


# ---------------------------------------------------------------------------
# Wrapper
# ---------------------------------------------------------------------------
def dnn_regressor_forward(x, params, *, compute_dtype=jnp.bfloat16):
    """Fused forward pass.  x: (B, n_in).  Returns (B, 1) float32.

    x is streamed in its native dtype (hand in bf16 if it was produced fused
    upstream; f32 otherwise) -- the cast to `compute_dtype` happens inside the
    kernel.  params layout (torch semantics y = x @ W.T + b):
      w1: (F, 50)  = linear1.weight.T     b1: (1, 50)
      w2: (50, 10) = linear2.weight.T     b2: (1, 10)
      w3: (1, 10)  = linear3.weight       b3: (1, 1)
    """
    B, F = x.shape
    # Resident operands: tiny, DMA'd once.  w1 pre-cast is a one-time, small op.
    w1 = params["w1"].astype(compute_dtype)
    b1 = params["b1"].astype(jnp.float32)
    w2 = params["w2"].astype(jnp.float32)
    b2 = params["b2"].astype(jnp.float32)
    w3 = params["w3"].astype(jnp.float32)
    b3 = params["b3"].astype(jnp.float32)

    vmem_limit = _vmem_budget_bytes()
    tb = _pick_batch_tile(B, F,
                          jnp.dtype(x.dtype).itemsize,
                          jnp.dtype(compute_dtype).itemsize,
                          vmem_limit)
    num_tiles = pl.cdiv(B, tb)

    out3 = pl.pallas_call(
        _mlp_kernel,
        out_shape=jax.ShapeDtypeStruct((num_tiles, 1, tb), jnp.float32),
        grid_spec=pltpu.PrefetchScalarGridSpec(
            num_scalar_prefetch=0,
            grid=(num_tiles,),
            in_specs=[
                # x batch tile: the only streamed operand.  The last tile may
                # be partial (no jnp.pad); its undefined tail rows only affect
                # themselves and are sliced away below.
                pl.BlockSpec((tb, F), lambda i: (i, 0)),
                # Weights/biases: whole-array blocks + constant index_maps
                # -> resident in VMEM, DMA'd once, reused across all tiles.
                pl.BlockSpec(w1.shape, lambda i: (0, 0)),
                pl.BlockSpec(b1.shape, lambda i: (0, 0)),
                pl.BlockSpec(w2.shape, lambda i: (0, 0)),
                pl.BlockSpec(b2.shape, lambda i: (0, 0)),
                pl.BlockSpec(w3.shape, lambda i: (0, 0)),
                pl.BlockSpec(b3.shape, lambda i: (0, 0)),
            ],
            # Lane-dense output: one (1, tb) row of per-sample scalars per tile.
            out_specs=pl.BlockSpec((1, 1, tb), lambda i: (i, 0, 0)),
        ),
        compiler_params=pltpu.CompilerParams(
            dimension_semantics=("parallel",),
            vmem_limit_bytes=vmem_limit),
    )(x, w1, b1, w2, b2, w3, b3)

    # (num_tiles, 1, tb) flattens row-major into batch order; drop the ragged
    # tail (those rows were computed from undefined padding data).
    return out3.reshape(num_tiles * tb, 1)[:B]


# ---------------------------------------------------------------------------
# Params / reference
# ---------------------------------------------------------------------------
def init_params(key, n_input_features):
    """Init mimicking nn.Linear's U(-1/sqrt(fan_in), 1/sqrt(fan_in))."""
    dims = [(n_input_features, 50), (50, 10), (10, 1)]
    params = {}
    for idx, (fan_in, fan_out) in enumerate(dims, start=1):
        key, kw, kb = jax.random.split(key, 3)
        bound = 1.0 / jnp.sqrt(jnp.float32(fan_in))
        # Layers 1/2 stored as (in, out) => y = x @ W + b.
        # Layer 3 stored in torch layout (out, in) = (1, 10) => y = h @ W.T + b.
        w_shape = (fan_in, fan_out) if idx < 3 else (fan_out, fan_in)
        params[f"w{idx}"] = jax.random.uniform(
            kw, w_shape, jnp.float32, -bound, bound)
        params[f"b{idx}"] = jax.random.uniform(
            kb, (1, fan_out), jnp.float32, -bound, bound)
    return params


def reference_forward(x, params, input_dtype=jnp.float32):
    """Plain-JAX reference.  `input_dtype` applies the same x/w1 rounding as
    the kernel so the comparison isolates kernel bugs from bf16 quantization."""
    hp = jax.lax.Precision.HIGHEST
    xr = x.astype(input_dtype).astype(jnp.float32)
    w1 = params["w1"].astype(input_dtype).astype(jnp.float32)
    h1 = jnp.maximum(jnp.dot(xr, w1, precision=hp) + params["b1"], 0.0)
    h2 = jnp.maximum(jnp.dot(h1, params["w2"], precision=hp) + params["b2"], 0.0)
    return jnp.dot(h2, params["w3"].T, precision=hp) + params["b3"]


if __name__ == "__main__":
    key = jax.random.PRNGKey(0)
    n_input_features = 32

    kx, kp = jax.random.split(key)
    params = init_params(kp, n_input_features)

    # Case 1: batch splits evenly into 4 tiles (megacore-friendly path).
    B1 = 256
    x1 = jax.random.normal(kx, (B1, n_input_features), jnp.float32)
    out1 = jax.block_until_ready(dnn_regressor_forward(x1, params))
    ref1 = reference_forward(x1, params, input_dtype=jnp.bfloat16)
    assert out1.shape == (B1, 1)
    assert bool(jnp.all(jnp.isfinite(out1)))
    assert jnp.allclose(out1, ref1, atol=3e-2, rtol=3e-2), \
        f"max abs err {float(jnp.max(jnp.abs(out1 - ref1)))}"

    # Case 2: ragged batch -> exercises the partial-last-block path (no pad).
    B2 = 100
    x2 = jax.random.normal(jax.random.fold_in(kx, 1),
                           (B2, n_input_features), jnp.float32)
    out2 = jax.block_until_ready(dnn_regressor_forward(x2, params))
    ref2 = reference_forward(x2, params, input_dtype=jnp.bfloat16)
    assert out2.shape == (B2, 1)
    assert bool(jnp.all(jnp.isfinite(out2)))
    assert jnp.allclose(out2, ref2, atol=3e-2, rtol=3e-2), \
        f"max abs err {float(jnp.max(jnp.abs(out2 - ref2)))}"

    print("KERNEL_OK")
</pallas_src>

<mosaic_0001>
module attributes {stable_mosaic.version = 11 : i64} {
  func.func @_mlp_kernel(%arg0: i32, %arg1: memref<64x32xf32, #tpu.memory_space<vmem>>, %arg2: memref<32x50xbf16, #tpu.memory_space<vmem>>, %arg3: memref<1x50xf32, #tpu.memory_space<vmem>>, %arg4: memref<50x10xf32, #tpu.memory_space<vmem>>, %arg5: memref<1x10xf32, #tpu.memory_space<vmem>>, %arg6: memref<1x10xf32, #tpu.memory_space<vmem>>, %arg7: memref<1x1xf32, #tpu.memory_space<vmem>>, %arg8: memref<1x1x64xf32, #tpu.memory_space<vmem>>) attributes {dimension_semantics = [#tpu.dimension_semantics<parallel>], iteration_bounds = array<i64: 4>, scalar_prefetch = 0 : i64, scratch_operands = 0 : i64, tpu.core_type = #tpu.core_type<tc>, window_params = [{transform_indices = @transform_0, window_bounds = array<i64: 64, 32>}, {pipeline_mode = #tpu.pipeline_mode<synchronous>, transform_indices = @transform_1, window_bounds = array<i64: 32, 50>}, {pipeline_mode = #tpu.pipeline_mode<synchronous>, transform_indices = @transform_2, window_bounds = array<i64: 1, 50>}, {pipeline_mode = #tpu.pipeline_mode<synchronous>, transform_indices = @transform_3, window_bounds = array<i64: 50, 10>}, {pipeline_mode = #tpu.pipeline_mode<synchronous>, transform_indices = @transform_4, window_bounds = array<i64: 1, 10>}, {pipeline_mode = #tpu.pipeline_mode<synchronous>, transform_indices = @transform_5, window_bounds = array<i64: 1, 10>}, {pipeline_mode = #tpu.pipeline_mode<synchronous>, transform_indices = @transform_6, window_bounds = array<i64: 1, 1>}, {transform_indices = @transform_7, window_bounds = array<i64: 1, 1, 64>}]} {
    %c0 = arith.constant 0 : index
    %c0_0 = arith.constant 0 : index
    %0 = vector.load %arg1[%c0, %c0_0] : memref<64x32xf32, #tpu.memory_space<vmem>>, vector<64x32xf32>
    %1 = arith.truncf %0 : vector<64x32xf32> to vector<64x32xbf16>
    %c0_1 = arith.constant 0 : index
    %c0_2 = arith.constant 0 : index
    %2 = vector.load %arg2[%c0_1, %c0_2] : memref<32x50xbf16, #tpu.memory_space<vmem>>, vector<32x50xbf16>
    %cst = arith.constant dense<0.000000e+00> : vector<64x50xf32>
    %3 = tpu.matmul %1, %2, %cst {dimension_numbers = #tpu.dot_dimension_numbers<[1], [0], [0], [1], [0, 0, 1, 1], [], []>} : vector<64x32xbf16>, vector<32x50xbf16>, vector<64x50xf32> -> vector<64x50xf32>
    %c0_3 = arith.constant 0 : index
    %c0_4 = arith.constant 0 : index
    %4 = vector.load %arg3[%c0_3, %c0_4] : memref<1x50xf32, #tpu.memory_space<vmem>>, vector<1x50xf32>
    %5 = vector.broadcast %4 : vector<1x50xf32> to vector<64x50xf32>
    %6 = arith.addf %3, %5 : vector<64x50xf32>
    %cst_5 = arith.constant 0.000000e+00 : f32
    %7 = vector.broadcast %cst_5 : f32 to vector<64x50xf32>
    %8 = arith.maximumf %6, %7 : vector<64x50xf32>
    %c0_6 = arith.constant 0 : index
    %c0_7 = arith.constant 0 : index
    %9 = vector.load %arg4[%c0_6, %c0_7] : memref<50x10xf32, #tpu.memory_space<vmem>>, vector<50x10xf32>
    %cst_8 = arith.constant dense<0.000000e+00> : vector<64x10xf32>
    %10 = tpu.matmul %8, %9, %cst_8 {dimension_numbers = #tpu.dot_dimension_numbers<[1], [0], [0], [1], [0, 0, 1, 1], [], []>} : vector<64x50xf32>, vector<50x10xf32>, vector<64x10xf32> -> vector<64x10xf32>
    %c0_9 = arith.constant 0 : index
    %c0_10 = arith.constant 0 : index
    %11 = vector.load %arg5[%c0_9, %c0_10] : memref<1x10xf32, #tpu.memory_space<vmem>>, vector<1x10xf32>
    %12 = vector.broadcast %11 : vector<1x10xf32> to vector<64x10xf32>
    %13 = arith.addf %10, %12 : vector<64x10xf32>
    %cst_11 = arith.constant 0.000000e+00 : f32
    %14 = vector.broadcast %cst_11 : f32 to vector<64x10xf32>
    %15 = arith.maximumf %13, %14 : vector<64x10xf32>
    %c0_12 = arith.constant 0 : index
    %c0_13 = arith.constant 0 : index
    %16 = vector.load %arg6[%c0_12, %c0_13] : memref<1x10xf32, #tpu.memory_space<vmem>>, vector<1x10xf32>
    %cst_14 = arith.constant dense<0.000000e+00> : vector<1x64xf32>
    %17 = tpu.matmul %16, %15, %cst_14 {dimension_numbers = #tpu.dot_dimension_numbers<[1], [1], [0], [0], [0, 0, 1, 0], [], []>} : vector<1x10xf32>, vector<64x10xf32>, vector<1x64xf32> -> vector<1x64xf32>
    %c0_15 = arith.constant 0 : index
    %c0_16 = arith.constant 0 : index
    %18 = vector.load %arg7[%c0_15, %c0_16] : memref<1x1xf32, #tpu.memory_space<vmem>>, vector<1x1xf32>
    %19 = vector.broadcast %18 : vector<1x1xf32> to vector<1x64xf32>
    %20 = arith.addf %17, %19 : vector<1x64xf32>
    %21 = vector.shape_cast %20 : vector<1x64xf32> to vector<1x1x64xf32>
    %c0_17 = arith.constant 0 : index
    %c0_18 = arith.constant 0 : index
    %c0_19 = arith.constant 0 : index
    %22 = vector.load %arg8[%c0_17, %c0_18, %c0_19] : memref<1x1x64xf32, #tpu.memory_space<vmem>>, vector<1x1x64xf32>
    tpu.vector_store %arg8[%c0_17, %c0_18, %c0_19], %21 {strides = array<i32>} : memref<1x1x64xf32, #tpu.memory_space<vmem>>, vector<1x1x64xf32>,
    return
  }
  func.func @transform_0(%arg0: i32) -> (i32, i32) {
    %c0_i32 = arith.constant 0 : i32
    %c0_i32_0 = arith.constant 0 : i32
    return %arg0, %c0_i32 : i32, i32
  }
  func.func @transform_1(%arg0: i32) -> (i32, i32) {
    %c0_i32 = arith.constant 0 : i32
    %c0_i32_0 = arith.constant 0 : i32
    %c0_i32_1 = arith.constant 0 : i32
    return %c0_i32, %c0_i32_0 : i32, i32
  }
  func.func @transform_2(%arg0: i32) -> (i32, i32) {
    %c0_i32 = arith.constant 0 : i32
    %c0_i32_0 = arith.constant 0 : i32
    %c0_i32_1 = arith.constant 0 : i32
    return %c0_i32, %c0_i32_0 : i32, i32
  }
  func.func @transform_3(%arg0: i32) -> (i32, i32) {
    %c0_i32 = arith.constant 0 : i32
    %c0_i32_0 = arith.constant 0 : i32
    %c0_i32_1 = arith.constant 0 : i32
    return %c0_i32, %c0_i32_0 : i32, i32
  }
  func.func @transform_4(%arg0: i32) -> (i32, i32) {
    %c0_i32 = arith.constant 0 : i32
    %c0_i32_0 = arith.constant 0 : i32
    %c0_i32_1 = arith.constant 0 : i32
    return %c0_i32, %c0_i32_0 : i32, i32
  }
  func.func @transform_5(%arg0: i32) -> (i32, i32) {
    %c0_i32 = arith.constant 0 : i32
    %c0_i32_0 = arith.constant 0 : i32
    %c0_i32_1 = arith.constant 0 : i32
    return %c0_i32, %c0_i32_0 : i32, i32
  }
  func.func @transform_6(%arg0: i32) -> (i32, i32) {
    %c0_i32 = arith.constant 0 : i32
    %c0_i32_0 = arith.constant 0 : i32
    %c0_i32_1 = arith.constant 0 : i32
    return %c0_i32, %c0_i32_0 : i32, i32
  }
  func.func @transform_7(%arg0: i32) -> (i32, i32, i32) {
    %c0_i32 = arith.constant 0 : i32
    %c0_i32_0 = arith.constant 0 : i32
    %c0_i32_1 = arith.constant 0 : i32
    return %arg0, %c0_i32, %c0_i32_0 : i32, i32, i32
  }
}

</mosaic_0001>

<llo_original>
// kernel: tpu_custom_call.1
$region0: #{tpu_custom_call.1}
  #allocation0 [shape = 'u32[]', space=smem, size = 0x4, offset = 0x4, fixed_abs, tag = 'smem constant byte address 0x4 - core index']
  #allocation1 [shape = 'u32[72,128]{1,0:T(1,128)}', space=vmem, size = 0x9000, scoped, tag = 'internal scratch']
  #allocation2 [shape = 'f32[1,1]{1,0:T(1,128)S(1)}', space=vmem, size = 0x200, scoped, tag = 'scoped memory for tpu_custom_call.1']
  %s0 = inlined_call_operand.vmem [shape: f32[256,32], index: 0, kind: input, shape index: {}]
  %s1 = inlined_call_operand.vmem [shape: bf16[32,50], index: 1, kind: input, shape index: {}]
  %s2 = inlined_call_operand.vmem [shape: f32[1,50], index: 2, kind: input, shape index: {}]
  %s3 = inlined_call_operand.vmem [shape: f32[50,10], index: 3, kind: input, shape index: {}]
  %s4 = inlined_call_operand.vmem [shape: f32[1,10], index: 4, kind: input, shape index: {}]
  %s5 = inlined_call_operand.vmem [shape: f32[1,10], index: 5, kind: input, shape index: {}]
  %s6 = inlined_call_operand.<no memory space> [shape: f32[1,1], index: 6, kind: input, shape index: {}]
  %s7 = inlined_call_operand.hbm [shape: f32[4,1,64], index: 7, kind: output, shape index: {}]
  %s8 = sld [smem:[#allocation0]]
  $region61: #{tpu_custom_call.1} parent=0
    _
  %s10 = ssub.s32 1, %s8
  %s11 = scalar_select 0, %s10, %s8
  %v12 = vstv %s6
  %13 = vst [vmem:[#allocation2] sm:$0x1] %v12
  $region1: #{tpu_custom_call.1} parent=0
    #allocation3 [shape = 'u8[1024]{0}', space=vmem, size = 0x400, scoped, tag = 'output window, operand 0']
    #allocation4 [shape = 's32[2]{0}', space=sflag, size = 0x8, scoped, tag = 'scoped memory for tpu_custom_call.1']
    %14 = vsyncpa [#allocation4], 0
    %s15 = scalar_lea.sflag [#allocation4], 1
    %16 = vsyncpa %s15, 0
    loop: start=0, step=1, limit=6
    $region2: #{tpu_custom_call.1} parent=1 // loop_pre_header
      _
    $region3: #{tpu_custom_call.1} parent=1 // loop_header
      %s18 = sphi 0, %s22
      %p19 = scmp.ge.s32.totalorder %s18, 6
      %s28 = sphi 0, %s30
      %s31 = sphi 0, %s28
      %s32 = sphi 0, %s31
      %s48 = sphi 0, %s32
      %s52 = sphi 0, %s52
      %s54 = sphi 0, %s52
      %s55 = sphi 0, %s54
      %s69 = sphi 0, %s55
      %s73 = sphi 0, %s73
      %s75 = sphi 0, %s73
      %s76 = sphi 0, %s75
      %s90 = sphi 0, %s76
      %s94 = sphi 0, %s94
      %s96 = sphi 0, %s94
      %s97 = sphi 0, %s96
      %s111 = sphi 0, %s97
      %s115 = sphi 0, %s115
      %s117 = sphi 0, %s115
      %s118 = sphi 0, %s117
      %s132 = sphi 0, %s118
      %s136 = sphi 0, %s136
      %s138 = sphi 0, %s136
      %s139 = sphi 0, %s138
      %s153 = sphi 0, %s139
      %s157 = sphi 0, %s157
      %s159 = sphi 0, %s157
      %s160 = sphi 0, %s159
      %s174 = sphi 0, %s160
      %s180 = sphi 0, %s182
      %s183 = sphi 0, %s180
      %s184 = sphi 0, %s183
      %s200 = sphi 0, %s184
    $region4: #{tpu_custom_call.1} parent=1 // loop_header_branch
      %21 = sbr.rel (%p19) target = $region8
    $region5: #{tpu_custom_call.1} parent=1 // loop_body
      %s23 = ssub.s32 %s18, 1
      %s24 = ssub.s32 %s18, 2
      %s25 = sadd.s32 %s18, 1
      %s26 = ssub.s32 %s18, %s25
      %p27 = scmp.eq.s32.totalorder %s26, 0
      %s29 = sadd.s32 %s28, 1
      %s30 = scalar_select %p27, %s28, %s29
      %p33 = pneg %p27
      %p34 = scmp.eq.s32.totalorder %s18, 3
      %p35 = por %p33, %p34
      %p36 = scmp.ne.s32.totalorder %s28, %s31
      %p37 = scmp.eq.s32.totalorder %s18, 0
      %p38 = por %p36, %p37
      %p39 = scmp.ne.s32.totalorder %s28, %s31
      %p40 = scmp.eq.s32.totalorder %s23, 3
      %p41 = por %p39, %p40
      %p42 = scmp.ne.s32.totalorder %s31, %s32
      %p43 = scmp.eq.s32.totalorder %s23, 0
      %p44 = por %p42, %p43
      %p45 = scmp.ne.s32.totalorder %s31, %s32
      %p46 = scmp.eq.s32.totalorder %s24, 3
      %p47 = por %p45, %p46
      %p49 = scmp.ne.s32.totalorder %s32, %s48
      %p50 = scmp.eq.s32.totalorder %s24, 0
      %p51 = por %p49, %p50
      %s53 = sadd.s32 %s52, 1
      %p56 = scmp.eq.s32.totalorder %s18, 3
      %p57 = scmp.ne.s32.totalorder %s52, %s54
      %p58 = scmp.eq.s32.totalorder %s18, 0
      %p59 = por %p57, %p58
      %p60 = scmp.ne.s32.totalorder %s52, %s54
      %p61 = scmp.eq.s32.totalorder %s23, 3
      %p62 = por %p60, %p61
      %p63 = scmp.ne.s32.totalorder %s54, %s55
      %p64 = scmp.eq.s32.totalorder %s23, 0
      %p65 = por %p63, %p64
      %p66 = scmp.ne.s32.totalorder %s54, %s55
      %p67 = scmp.eq.s32.totalorder %s24, 3
      %p68 = por %p66, %p67
      %p70 = scmp.ne.s32.totalorder %s55, %s69
      %p71 = scmp.eq.s32.totalorder %s24, 0
      %p72 = por %p70, %p71
      %s74 = sadd.s32 %s73, 1
      %p77 = scmp.eq.s32.totalorder %s18, 3
      %p78 = scmp.ne.s32.totalorder %s73, %s75
      %p79 = scmp.eq.s32.totalorder %s18, 0
      %p80 = por %p78, %p79
      %p81 = scmp.ne.s32.totalorder %s73, %s75
      %p82 = scmp.eq.s32.totalorder %s23, 3
      %p83 = por %p81, %p82
      %p84 = scmp.ne.s32.totalorder %s75, %s76
      %p85 = scmp.eq.s32.totalorder %s23, 0
      %p86 = por %p84, %p85
      %p87 = scmp.ne.s32.totalorder %s75, %s76
      %p88 = scmp.eq.s32.totalorder %s24, 3
      %p89 = por %p87, %p88
      %p91 = scmp.ne.s32.totalorder %s76, %s90
      %p92 = scmp.eq.s32.totalorder %s24, 0
      %p93 = por %p91, %p92
      %s95 = sadd.s32 %s94, 1
      %p98 = scmp.eq.s32.totalorder %s18, 3
      %p99 = scmp.ne.s32.totalorder %s94, %s96
      %p100 = scmp.eq.s32.totalorder %s18, 0
      %p101 = por %p99, %p100
      %p102 = scmp.ne.s32.totalorder %s94, %s96
      %p103 = scmp.eq.s32.totalorder %s23, 3
      %p104 = por %p102, %p103
      %p105 = scmp.ne.s32.totalorder %s96, %s97
      %p106 = scmp.eq.s32.totalorder %s23, 0
      %p107 = por %p105, %p106
      %p108 = scmp.ne.s32.totalorder %s96, %s97
      %p109 = scmp.eq.s32.totalorder %s24, 3
      %p110 = por %p108, %p109
      %p112 = scmp.ne.s32.totalorder %s97, %s111
      %p113 = scmp.eq.s32.totalorder %s24, 0
      %p114 = por %p112, %p113
      %s116 = sadd.s32 %s115, 1
      %p119 = scmp.eq.s32.totalorder %s18, 3
      %p120 = scmp.ne.s32.totalorder %s115, %s117
      %p121 = scmp.eq.s32.totalorder %s18, 0
      %p122 = por %p120, %p121
      %p123 = scmp.ne.s32.totalorder %s115, %s117
      %p124 = scmp.eq.s32.totalorder %s23, 3
      %p125 = por %p123, %p124
      %p126 = scmp.ne.s32.totalorder %s117, %s118
      %p127 = scmp.eq.s32.totalorder %s23, 0
      %p128 = por %p126, %p127
      %p129 = scmp.ne.s32.totalorder %s117, %s118
      %p130 = scmp.eq.s32.totalorder %s24, 3
      %p131 = por %p129, %p130
      %p133 = scmp.ne.s32.totalorder %s118, %s132
      %p134 = scmp.eq.s32.totalorder %s24, 0
      %p135 = por %p133, %p134
      %s137 = sadd.s32 %s136, 1
      %p140 = scmp.eq.s32.totalorder %s18, 3
      %p141 = scmp.ne.s32.totalorder %s136, %s138
      %p142 = scmp.eq.s32.totalorder %s18, 0
      %p143 = por %p141, %p142
      %p144 = scmp.ne.s32.totalorder %s136, %s138
      %p145 = scmp.eq.s32.totalorder %s23, 3
      %p146 = por %p144, %p145
      %p147 = scmp.ne.s32.totalorder %s138, %s139
      %p148 = scmp.eq.s32.totalorder %s23, 0
      %p149 = por %p147, %p148
      %p150 = scmp.ne.s32.totalorder %s138, %s139
      %p151 = scmp.eq.s32.totalorder %s24, 3
      %p152 = por %p150, %p151
      %p154 = scmp.ne.s32.totalorder %s139, %s153
      %p155 = scmp.eq.s32.totalorder %s24, 0
      %p156 = por %p154, %p155
      %s158 = sadd.s32 %s157, 1
      %p161 = scmp.eq.s32.totalorder %s18, 3
      %p162 = scmp.ne.s32.totalorder %s157, %s159
      %p163 = scmp.eq.s32.totalorder %s18, 0
      %p164 = por %p162, %p163
      %p165 = scmp.ne.s32.totalorder %s157, %s159
      %p166 = scmp.eq.s32.totalorder %s23, 3
      %p167 = por %p165, %p166
      %p168 = scmp.ne.s32.totalorder %s159, %s160
      %p169 = scmp.eq.s32.totalorder %s23, 0
      %p170 = por %p168, %p169
      %p171 = scmp.ne.s32.totalorder %s159, %s160
      %p172 = scmp.eq.s32.totalorder %s24, 3
      %p173 = por %p171, %p172
      %p175 = scmp.ne.s32.totalorder %s160, %s174
      %p176 = scmp.eq.s32.totalorder %s24, 0
      %p177 = por %p175, %p176
      %s178 = ssub.s32 %s18, %s25
      %p179 = scmp.eq.s32.totalorder %s178, 0
      %s181 = sadd.s32 %s180, 1
      %s182 = scalar_select %p179, %s180, %s181
      %p185 = pneg %p179
      %p186 = scmp.eq.s32.totalorder %s18, 3
      %p187 = por %p185, %p186
      %p188 = scmp.ne.s32.totalorder %s180, %s183
      %p189 = scmp.eq.s32.totalorder %s18, 0
      %p190 = por %p188, %p189
      %p191 = scmp.ne.s32.totalorder %s180, %s183
      %p192 = scmp.eq.s32.totalorder %s23, 3
      %p193 = por %p191, %p192
      %p194 = scmp.ne.s32.totalorder %s183, %s184
      %p195 = scmp.eq.s32.totalorder %s23, 0
      %p196 = por %p194, %p195
      %p197 = scmp.ne.s32.totalorder %s183, %s184
      %p198 = scmp.eq.s32.totalorder %s24, 3
      %p199 = por %p197, %p198
      %p201 = scmp.ne.s32.totalorder %s184, %s200
      %p202 = scmp.eq.s32.totalorder %s24, 0
      %p203 = por %p201, %p202
      %p204 = scmp.le.s32.totalorder 1, %s18
      %p205 = scmp.lt.s32.totalorder %s18, 5
      %p206 = pnand %p204, %p205
      %p207 = pneg %p206
      // Predicated region
      $region9: #{tpu_custom_call.1} parent=5 // pred_check
        _
      $region10: #{tpu_custom_call.1} parent=5 // pred_check_branch
        %209 = sbr.rel (%p206) target = $region12
      $region11: #{tpu_custom_call.1} parent=5 // pred_region
        %s210 = ssub.s32 %s18, 1
        // Predicated region
        $region13: #{tpu_custom_call.1} parent=11 // pred_check
          %p211 = pneg %p65
        $region14: #{tpu_custom_call.1} parent=11 // pred_check_branch
          %213 = sbr.rel (%p211) target = $region16
        $region15: #{tpu_custom_call.1} parent=11 // pred_region
          _
        $region16: #{tpu_custom_call.1} parent=11 // pred_fallthru
          _
        // Predicated region
        $region17: #{tpu_custom_call.1} parent=11 // pred_check
          %p214 = pneg %p86
        $region18: #{tpu_custom_call.1} parent=11 // pred_check_branch
          %216 = sbr.rel (%p214) target = $region20
        $region19: #{tpu_custom_call.1} parent=11 // pred_region
          _
        $region20: #{tpu_custom_call.1} parent=11 // pred_fallthru
          _
        // Predicated region
        $region21: #{tpu_custom_call.1} parent=11 // pred_check
          %p217 = pneg %p107
        $region22: #{tpu_custom_call.1} parent=11 // pred_check_branch
          %219 = sbr.rel (%p217) target = $region24
        $region23: #{tpu_custom_call.1} parent=11 // pred_region
          _
        $region24: #{tpu_custom_call.1} parent=11 // pred_fallthru
          _
        // Predicated region
        $region25: #{tpu_custom_call.1} parent=11 // pred_check
          %p220 = pneg %p128
        $region26: #{tpu_custom_call.1} parent=11 // pred_check_branch
          %222 = sbr.rel (%p220) target = $region28
        $region27: #{tpu_custom_call.1} parent=11 // pred_region
          _
        $region28: #{tpu_custom_call.1} parent=11 // pred_fallthru
          _
        // Predicated region
        $region29: #{tpu_custom_call.1} parent=11 // pred_check
          %p223 = pneg %p149
        $region30: #{tpu_custom_call.1} parent=11 // pred_check_branch
          %225 = sbr.rel (%p223) target = $region32
        $region31: #{tpu_custom_call.1} parent=11 // pred_region
          _
        $region32: #{tpu_custom_call.1} parent=11 // pred_fallthru
          _
        // Predicated region
        $region33: #{tpu_custom_call.1} parent=11 // pred_check
          %p226 = pneg %p170
        $region34: #{tpu_custom_call.1} parent=11 // pred_check_branch
          %228 = sbr.rel (%p226) target = $region36
        $region35: #{tpu_custom_call.1} parent=11 // pred_region
          _
        $region36: #{tpu_custom_call.1} parent=11 // pred_fallthru
          _
      $region12: #{tpu_custom_call.1} parent=5 // pred_fallthru
        _
      %p229 = scmp.lt.s32.totalorder %s18, 4
      // Predicated region
      $region37: #{tpu_custom_call.1} parent=5 // pred_check
        %p230 = pneg %p229
      $region38: #{tpu_custom_call.1} parent=5 // pred_check_branch
        %232 = sbr.rel (%p230) target = $region40
      $region39: #{tpu_custom_call.1} parent=5 // pred_region
        // Predicated region
        $region41: #{tpu_custom_call.1} parent=39 // pred_check
          %p233 = pneg %p38
        $region42: #{tpu_custom_call.1} parent=39 // pred_check_branch
          %235 = sbr.rel (%p233) target = $region44
        $region43: #{tpu_custom_call.1} parent=39 // pred_region
          %s236 = smul.u32 8, %s18
          %p237 = scmp.lt.s32.totalorder %s236, 31
          %s238 = scalar_select %p237, %s236, 31
          %s239 = smul.addr %s238, 8
          %s240 = scalar_lea.vmem %s0, %s239
          %s241 = smul.u32 8, %s18
        $region44: #{tpu_custom_call.1} parent=39 // pred_fallthru
          _
      $region40: #{tpu_custom_call.1} parent=5 // pred_fallthru
        _
      %p242 = scmp.le.s32.totalorder 1, %s18
      %p243 = scmp.lt.s32.totalorder %s18, 5
      %p244 = pnand %p242, %p243
      %p245 = pneg %p244
      // Predicated region
      $region45: #{tpu_custom_call.1} parent=5 // pred_check
        _
      $region46: #{tpu_custom_call.1} parent=5 // pred_check_branch
        %247 = sbr.rel (%p244) target = $region48
      $region47: #{tpu_custom_call.1} parent=5 // pred_region
        %s248 = ssub.s32 %s18, 1
        %s249 = smul.u32 8, %s23
        %p250 = scmp.lt.s32.totalorder %s249, 31
        %s251 = scalar_select %p250, %s249, 31
        %s252 = smul.addr %s251, 8
        %s253 = scalar_lea.vmem %s0, %s252
        %p254 = pneg %p44
        %p255 = pneg %p41
        %p256 = pneg %p65
        %p257 = pneg %p62
        %p258 = pneg %p86
        %p259 = pneg %p83
        %p260 = pneg %p107
        %p261 = pneg %p104
        %p262 = pneg %p128
        %p263 = pneg %p125
        %p264 = pneg %p149
        %p265 = pneg %p146
        %p266 = pneg %p170
        %p267 = pneg %p167
        %p268 = pneg %p196
        %p269 = pneg %p193
        %s270 = sand.u32 %s183, 1
        %s271 = scalar_lea.sflag [#allocation4], %s270
        %s272 = sand.u32 %s183, 1
        %s273 = scalar_lea.vmem [#allocation3], %s272
        %s274 = smul.u32 8, %s23
        %p275 = scmp.lt.s32.totalorder %s274, 31
        %s276 = scalar_select %p275, %s274, 31
        %s277 = smul.addr %s276, 8
        %s278 = scalar_lea.vmem %s0, %s277
        %s279 = smul.u32 8, %s23
        %v281 = vld [vmem:[%s278] sm:$0xff]
        %v282 = vld [vmem:[%s278 + $0x8] sm:$0xff]
        %v283 = vld [vmem:[%s278 + $0x10] sm:$0xff]
        %v284 = vld [vmem:[%s278 + $0x18] sm:$0xff]
        %v285 = vld [vmem:[%s278 + $0x20] sm:$0xff]
        %v286 = vld [vmem:[%s278 + $0x28] sm:$0xff]
        %v287 = vld [vmem:[%s278 + $0x30] sm:$0xff]
        %v288 = vld [vmem:[%s278 + $0x38] sm:$0xff]
        %v289 = vpack.c.bf16 %v282, %v281
        %v290 = vpack.c.bf16 %v284, %v283
        %v291 = vpack.c.bf16 %v286, %v285
        %v292 = vpack.c.bf16 %v288, %v287
        %v293 = vld [vmem:[%s1] sm:$0xf]
        %v294 = vld [vmem:[%s1 + $0x4] sm:$0xf]
        %v295 = vld [vmem:[%s1 + $0x8] sm:$0xf]
        %v296 = vld [vmem:[%s1 + $0xc] sm:$0xf]
        %v297 = vld [vmem:[%s2] sm:$0x1]
        %v299 = vperm.slane %v297, 0
        %v305 = vunpack.c.l.b16 %v293
        %v306 = vunpack.c.l.b16 %v294
        %v307 = vunpack.c.l.b16 %v295
        %v308 = vunpack.c.l.b16 %v296
        %v309 = vpack.c.b16 %v306, %v305
        %v310 = vpack.c.b16 %v308, %v307
        %vm313 = vcmask 261120
        %v315 = vsel %vm313, %v289, 0
        %v318 = vsel %vm313, %v290, 0
        %v321 = vsel %vm313, %v291, 0
        %v324 = vsel %vm313, %v292, 0
        %326 = vmatpush.bf16.msra.mxu0 0
        %327 = vmatpush.bf16.msra.mxu0 0
        %328 = vmatpush.bf16.msra.mxu0 0
        %329 = vmatpush.bf16.msra.mxu0 0
        %330 = vmatpush.bf16.msra.mxu0 0
        %331 = vmatpush.bf16.msra.mxu0 0
        %332 = vmatpush.bf16.msra.mxu0 %v310
        %333 = vmatpush.bf16.msra.mxu0 %v309
        %334 = vmatmul.bf16.gmra.mxu0 %v315
        %v335 = vpop.f32.mrf.mxu0
        %v336 = vadd.f32 %v299, %v335
        %v337 = vpop.f32.mrf.mxu0
        %v338 = vadd.f32 %v299, %v337
        %339 = vmatmul.bf16.gmra.mxu0 %v318
        %v340 = vpop.f32.mrf.mxu0
        %v341 = vadd.f32 %v299, %v340
        %v342 = vpop.f32.mrf.mxu0
        %v343 = vadd.f32 %v299, %v342
        %344 = vmatmul.bf16.gmra.mxu0 %v321
        %v345 = vpop.f32.mrf.mxu0
        %v346 = vadd.f32 %v299, %v345
        %v347 = vpop.f32.mrf.mxu0
        %v348 = vadd.f32 %v299, %v347
        %349 = vmatmul.bf16.gmra.mxu0 %v324
        %v350 = vpop.f32.mrf.mxu0
        %v351 = vadd.f32 %v299, %v350
        %v352 = vpop.f32.mrf.mxu0
        %v353 = vadd.f32 %v299, %v352
        %354 = vdwg.mxu0
        %v355 = vmax.f32 %v336, 0.0
        %v356 = vmax.f32 %v338, 0.0
        %v357 = vmax.f32 %v341, 0.0
        %v358 = vmax.f32 %v343, 0.0
        %v359 = vmax.f32 %v346, 0.0
        %v360 = vmax.f32 %v348, 0.0
        %v361 = vmax.f32 %v351, 0.0
        %v362 = vmax.f32 %v353, 0.0
        %v363 = vld [vmem:[%s3] sm:$0xff]
        %v364 = vld [vmem:[%s3 + $0x8] sm:$0xff]
        %v365 = vld [vmem:[%s3 + $0x10] sm:$0xff]
        %v366 = vld [vmem:[%s3 + $0x18] sm:$0xff]
        %v367 = vld [vmem:[%s3 + $0x20] sm:$0xff]
        %v368 = vld [vmem:[%s3 + $0x28] sm:$0xff]
        %v369 = vld [vmem:[%s3 + $0x30] sm:$0x3]
        %v370 = vld [vmem:[%s4] sm:$0x1]
        %v372 = vperm.slane %v370, 0
        %vm374 = vcmask 408576
        %v376 = vsel %vm374, %v355, 0
        %v379 = vsel %vm374, %v356, 0
        %v382 = vsel %vm374, %v357, 0
        %v385 = vsel %vm374, %v358, 0
        %v388 = vsel %vm374, %v359, 0
        %v391 = vsel %vm374, %v360, 0
        %v394 = vsel %vm374, %v361, 0
        %v397 = vsel %vm374, %v362, 0
        %vm399 = vcmask 1041408
        %v401 = vsel %vm399, %v369, 0
        %403 = vmatpush.msra.mxu0 0.0
        %404 = vmatpush.msra.mxu0 0.0
        %405 = vmatpush.msra.mxu0 0.0
        %406 = vmatpush.msra.mxu0 0.0
        %407 = vmatpush.msra.mxu0 0.0
        %408 = vmatpush.msra.mxu0 0.0
        %409 = vmatpush.msra.mxu0 0.0
        %410 = vmatpush.msra.mxu0 0.0
        %411 = vmatpush.msra.mxu0 0.0
        %412 = vmatpush.msra.mxu0 %v401
        %413 = vmatpush.msra.mxu0 %v368
        %414 = vmatpush.msra.mxu0 %v367
        %415 = vmatpush.msra.mxu0 %v366
        %416 = vmatpush.msra.mxu0 %v365
        %417 = vmatpush.msra.mxu0 %v364
        %418 = vmatpush.msra.mxu0 %v363
        %419 = vmatmul.f32.gmra.mxu0 %v376
        %v420 = vpop.f32.mrf.mxu0
        %v421 = vadd.f32 %v372, %v420
        %422 = vmatmul.f32.gmra.mxu0 %v379
        %v423 = vpop.f32.mrf.mxu0
        %v424 = vadd.f32 %v372, %v423
        %425 = vmatmul.f32.gmra.mxu0 %v382
        %v426 = vpop.f32.mrf.mxu0
        %v427 = vadd.f32 %v372, %v426
        %428 = vmatmul.f32.gmra.mxu0 %v385
        %v429 = vpop.f32.mrf.mxu0
        %v430 = vadd.f32 %v372, %v429
        %431 = vmatmul.f32.gmra.mxu0 %v388
        %v432 = vpop.f32.mrf.mxu0
        %v433 = vadd.f32 %v372, %v432
        %434 = vmatmul.f32.gmra.mxu0 %v391
        %v435 = vpop.f32.mrf.mxu0
        %v436 = vadd.f32 %v372, %v435
        %437 = vmatmul.f32.gmra.mxu0 %v394
        %v438 = vpop.f32.mrf.mxu0
        %v439 = vadd.f32 %v372, %v438
        %440 = vmatmul.f32.gmra.mxu0 %v397
        %v441 = vpop.f32.mrf.mxu0
        %v442 = vadd.f32 %v372, %v441
        %443 = vdwg.mxu0
        %v444 = vmax.f32 %v421, 0.0
        %v445 = vmax.f32 %v424, 0.0
        %v446 = vmax.f32 %v427, 0.0
        %v447 = vmax.f32 %v430, 0.0
        %v448 = vmax.f32 %v433, 0.0
        %v449 = vmax.f32 %v436, 0.0
        %v450 = vmax.f32 %v439, 0.0
        %v451 = vmax.f32 %v442, 0.0
        %v452 = vld [vmem:[%s5] sm:$0x1]
        %v453 = vld [vmem:[#allocation2] sm:$0x1]
        %455 = vset.pattern.permute.xlu0 0
        %456 = vperm.xlu0 %455, %v453
        %v457 = vpop.permute.xlu0 %456
        %v459 = vperm.slane %v457, 0
        %vm460 = vcmask 80896
        %v462 = vsel %vm460, %v452, 0
        %v465 = vsel %vm460, %v444, 0
        %v468 = vsel %vm460, %v445, 0
        %v471 = vsel %vm460, %v446, 0
        %v474 = vsel %vm460, %v447, 0
        %v477 = vsel %vm460, %v448, 0
        %v480 = vsel %vm460, %v449, 0
        %v483 = vsel %vm460, %v450, 0
        %v486 = vsel %vm460, %v451, 0
        %488 = vmatpush.xpose.msra.mxu0 0.0
        %489 = vmatpush.xpose.msra.mxu0 0.0
        %490 = vmatpush.xpose.msra.mxu0 0.0
        %491 = vmatpush.xpose.msra.mxu0 0.0
        %492 = vmatpush.xpose.msra.mxu0 0.0
        %493 = vmatpush.xpose.msra.mxu0 0.0
        %494 = vmatpush.xpose.msra.mxu0 0.0
        %495 = vmatpush.xpose.msra.mxu0 0.0
        %496 = vmatpush.xpose.msra.mxu0 %v486
        %497 = vmatpush.xpose.msra.mxu0 %v483
        %498 = vmatpush.xpose.msra.mxu0 %v480
        %499 = vmatpush.xpose.msra.mxu0 %v477
        %500 = vmatpush.xpose.msra.mxu0 %v474
        %501 = vmatpush.xpose.msra.mxu0 %v471
        %502 = vmatpush.xpose.msra.mxu0 %v468
        %503 = vmatpush.xpose.msra.mxu0 %v465
        %504 = vmatmul.f32.gmra.mxu0 %v462
        %v505 = vpop.f32.mrf.mxu0
        %v506 = vadd.f32 %v459, %v505
        %507 = vdwg.mxu0
        %vm508 = vcmask 516096
        %509 = vst.msk [vmem:[%s273] sm:$0x1] %vm508, %v506
        %s510 = sand.u32 %s183, 1
        %s511 = scalar_lea.sflag [#allocation4], %s510
        %s512 = sand.u32 %s183, 1
        %s513 = scalar_lea.vmem [#allocation3], %s512
        // Predicated region
        $region49: #{tpu_custom_call.1} parent=47 // pred_check
          %p514 = pneg %p193
        $region50: #{tpu_custom_call.1} parent=47 // pred_check_branch
          %516 = sbr.rel (%p514) target = $region52
        $region51: #{tpu_custom_call.1} parent=47 // pred_region
          %518 = vsyncadd %s511, 0
          %s519 = scalar_lea.hbm %s7, %s23
          %s521 = sshll.u32 %s513, 4
          %s522 = int_to_ptr.vmem [resolvable:$true] %s521
          %s523 = sshll.u32 %s519, 4
          %s524 = int_to_ptr.hbm [resolvable:$true] %s523
          %526 = dma.vmem_to_hbm [thread:$0]  %s522, 16, %s524, %s511
        $region52: #{tpu_custom_call.1} parent=47 // pred_fallthru
          _
      $region48: #{tpu_custom_call.1} parent=5 // pred_fallthru
        _
      %p527 = scmp.le.s32.totalorder 2, %s18
      // Predicated region
      $region53: #{tpu_custom_call.1} parent=5 // pred_check
        %p528 = pneg %p527
      $region54: #{tpu_custom_call.1} parent=5 // pred_check_branch
        %530 = sbr.rel (%p528) target = $region56
      $region55: #{tpu_custom_call.1} parent=5 // pred_region
        %s531 = ssub.s32 %s18, 2
        // Predicated region
        $region57: #{tpu_custom_call.1} parent=55 // pred_check
          %p532 = pneg %p199
        $region58: #{tpu_custom_call.1} parent=55 // pred_check_branch
          %534 = sbr.rel (%p532) target = $region60
        $region59: #{tpu_custom_call.1} parent=55 // pred_region
          %s535 = sand.u32 %s184, 1
          %s536 = scalar_lea.sflag [#allocation4], %s535
          %s537 = sand.u32 %s184, 1
          %s538 = scalar_lea.vmem [#allocation3], %s537
          %540 = dma.done %s536, 16
        $region60: #{tpu_custom_call.1} parent=55 // pred_fallthru
          _
      $region56: #{tpu_custom_call.1} parent=5 // pred_fallthru
        _
    $region6: #{tpu_custom_call.1} parent=1 // loop_footer
      %s22 = sadd.s32 1, %s18
    $region7: #{tpu_custom_call.1} parent=1 // loop_footer_branch
      %17 = sbr.rel target = $region3
    $region8: #{tpu_custom_call.1} parent=1 // loop_exit
      _
    %541 = vsyncpa [#allocation4], 1
    %s542 = scalar_lea.sflag [#allocation4], 1
    %543 = vsyncpa %s542, 1

</llo_original>
